<compile_context>
chip_gen: v7x
topology: tpu7x:2x2x1
jax: 0.10.0
libtpu: 0.0.40
codegen_flags: <defaults>
</compile_context>

<pallas_src>
import functools

import jax
import jax.numpy as jnp
from jax import lax
from jax.experimental import pallas as pl
from jax.experimental.pallas import tpu as pltpu


_VMEM_LIMIT = 32 * 1024 * 1024  # safe on v5e/v6e/v7x (v7x physical VMEM = 64 MiB)
_CIN_PAD = 8                    # first conv: zero-pad 3 input channels -> 8


# ----------------------------------------------------------------------------
# Pallas kernel 1: fused 3x3 conv + bias + ReLU, expressed as 9 shifted GEMMs.
#   x_ref : (R, Cin)      f32   flattened zero-padded input rows,
#                                R = (H+2)*(W+2) + 2
#   w_ref : (9, Cin, Cout) bf16  per-tap weights, tap t = kh*3 + kw
#   b_ref : (1, Cout)      f32
#   o_ref : (M, Cout)      bf16  M = H*(W+2)  (2 junk columns cropped outside)
# For output row r = h*(W+2)+w the tap (kh,kw) contribution is
#   x_flat[r + kh*(W+2) + kw] @ W[kh,kw]   (exact for w < W; junk for w >= W).
# ----------------------------------------------------------------------------
def _conv3x3_kernel(x_ref, w_ref, b_ref, o_ref, *, offsets, m):
    cout = o_ref.shape[-1]
    acc = jnp.zeros((m, cout), jnp.float32)
    for t, off in enumerate(offsets):
        # static row-window of the f32 block; cast to bf16 only for the MXU.
        a = x_ref[pl.ds(off, m), :].astype(jnp.bfloat16)
        acc = acc + jnp.dot(a, w_ref[t], preferred_element_type=jnp.float32)
    acc = jnp.maximum(acc + b_ref[...], 0.0)     # bias + ReLU in f32 (VPU)
    o_ref[...] = acc.astype(o_ref.dtype)


def conv3x3_relu(x, w9, b):
    """x: (N, H, W, Cin) (any float dtype); w9: (9, Cin, Cout) bf16; b: (1, Cout) f32.

    Returns (N, H, W, Cout) bf16.  Stride 1, padding 1 ("SAME"), fused ReLU.
    """
    N, H, W, Cin = x.shape
    Cout = w9.shape[-1]
    Wp = W + 2
    M = H * Wp                      # rows computed per image (incl. 2 junk cols)
    R = (H + 2) * Wp + 2            # padded flat rows per image

    xp = jnp.pad(x.astype(jnp.float32), ((0, 0), (1, 1), (1, 1), (0, 0)))
    xf = jnp.pad(xp.reshape(N, (H + 2) * Wp, Cin), ((0, 0), (0, 2), (0, 0)))

    offsets = tuple(kh * Wp + kw for kh in range(3) for kw in range(3))
    kernel = functools.partial(_conv3x3_kernel, offsets=offsets, m=M)

    out = pl.pallas_call(
        kernel,
        out_shape=jax.ShapeDtypeStruct((N, M, Cout), jnp.bfloat16),
        grid_spec=pltpu.PrefetchScalarGridSpec(
            num_scalar_prefetch=0,
            grid=(N,),
            in_specs=[
                pl.BlockSpec((None, R, Cin), lambda n: (n, 0, 0)),
                pl.BlockSpec((9, Cin, Cout), lambda n: (0, 0, 0)),
                pl.BlockSpec((1, Cout), lambda n: (0, 0)),
            ],
            out_specs=pl.BlockSpec((None, M, Cout), lambda n: (n, 0, 0)),
        ),
        compiler_params=pltpu.CompilerParams(
            dimension_semantics=("parallel",),
            vmem_limit_bytes=_VMEM_LIMIT,
        ),
    )(xf, w9, b)

    return out.reshape(N, H, Wp, Cout)[:, :, :W, :]


# ----------------------------------------------------------------------------
# Pallas kernel 2: LPIPS per-level distance.
#   i = f_in / max(||f_in||_2 over C, 1e-12)   (== F.normalize(p=2, dim=-3))
#   t = f_tgt / max(||f_tgt||_2 over C, 1e-12)
#   d = mean_{H,W}( sum_C w_C * (i - t)^2 )    (== 1x1 "lin" conv then mean)
# All math in f32 (inputs are bf16 feature maps).
# ----------------------------------------------------------------------------
def _lpips_dist_kernel(fi_ref, ft_ref, w_ref, o_ref):
    fi = fi_ref[0].astype(jnp.float32)   # (HW, C)
    ft = ft_ref[0].astype(jnp.float32)
    eps2 = 1e-24                         # (1e-12)**2 -> 1/max(norm, 1e-12)
    inv_i = lax.rsqrt(jnp.maximum(jnp.sum(fi * fi, axis=-1, keepdims=True), eps2))
    inv_t = lax.rsqrt(jnp.maximum(jnp.sum(ft * ft, axis=-1, keepdims=True), eps2))
    diff = fi * inv_i - ft * inv_t
    ch = jnp.sum(diff * diff, axis=0, keepdims=True)     # reduce HW first: (1, C)
    o_ref[0, 0] = jnp.sum(ch * w_ref[...]) * (1.0 / fi.shape[0])


def lpips_distance(fi, ft, w):
    """fi, ft: (B, HW, C) bf16/f32; w: (1, C) f32.  Returns (B,) distances."""
    B, HW, C = fi.shape
    out = pl.pallas_call(
        _lpips_dist_kernel,
        out_shape=jax.ShapeDtypeStruct((B, 1), jnp.float32),
        grid_spec=pltpu.PrefetchScalarGridSpec(
            num_scalar_prefetch=0,
            grid=(B,),
            in_specs=[
                pl.BlockSpec((1, HW, C), lambda n: (n, 0, 0)),
                pl.BlockSpec((1, HW, C), lambda n: (n, 0, 0)),
                pl.BlockSpec((1, C), lambda n: (0, 0)),
            ],
            out_specs=pl.BlockSpec((1, 1), lambda n: (n, 0),
                                   memory_space=pltpu.SMEM),
        ),
        compiler_params=pltpu.CompilerParams(
            dimension_semantics=("parallel",),
            vmem_limit_bytes=_VMEM_LIMIT,
        ),
    )(fi, ft, w)
    return out[:, 0]


# ----------------------------------------------------------------------------
# VGG16 feature extractor (relu1_2, relu2_2, relu3_3, relu4_3, relu5_3 slices)
# ----------------------------------------------------------------------------
VGG_BLOCKS = [
    [(3, 64), (64, 64)],
    [(64, 128), (128, 128)],
    [(128, 256), (256, 256), (256, 256)],
    [(256, 512), (512, 512), (512, 512)],
    [(512, 512), (512, 512), (512, 512)],
]
LIN_CHANNELS = [64, 128, 256, 512, 512]

_IMAGENET_MEAN = jnp.array([0.485, 0.456, 0.406], dtype=jnp.float32)
_IMAGENET_STD = jnp.array([0.229, 0.224, 0.225], dtype=jnp.float32)


def maxpool2(x):
    N, H, W, C = x.shape
    return jnp.max(x.reshape(N, H // 2, 2, W // 2, 2, C), axis=(2, 4))


def avgpool2(x):
    # TODO(synk): `Downsample(scale_factor=0.5)` is unspecified in the reference;
    # implemented as 2x2 area-average downsampling (== F.interpolate mode='area').
    N, H, W, C = x.shape
    return jnp.mean(x.reshape(N, H // 2, 2, W // 2, 2, C), axis=(2, 4))


def vgg_features(x_nhwc, vgg_params):
    """Returns the 5 LPIPS feature maps (NHWC, bf16)."""
    x = (x_nhwc - _IMAGENET_MEAN) / _IMAGENET_STD
    # zero-pad 3 -> _CIN_PAD channels; conv1_1 weights are zero-padded to match (exact).
    x = jnp.pad(x, ((0, 0), (0, 0), (0, 0), (0, _CIN_PAD - 3)))
    feats = []
    ci = 0
    for bi, block in enumerate(VGG_BLOCKS):
        if bi > 0:
            x = maxpool2(x)
        for _ in block:
            w9, b = vgg_params[ci]
            x = conv3x3_relu(x, w9, b)
            ci += 1
        feats.append(x)
    return feats


# ----------------------------------------------------------------------------
# LPIPS + LPIPSLoss
# ----------------------------------------------------------------------------
def lpips(x_nhwc, t_nhwc, vgg_params, lin_ws):
    """Per-sample LPIPS distance, shape (B,)."""
    B = x_nhwc.shape[0]
    both = jnp.concatenate([x_nhwc, t_nhwc], axis=0)   # run inp+tgt through VGG together
    feats = vgg_features(both, vgg_params)
    dists = []
    for f, w in zip(feats, lin_ws):
        N2, H, W, C = f.shape
        ff = f.reshape(N2, H * W, C)
        dists.append(lpips_distance(ff[:B], ff[B:], w.reshape(1, C)))
    return jnp.sum(jnp.stack(dists, axis=-1), axis=-1)


def lpips_loss(inp_nchw, tgt_nchw, vgg_params, lin_ws, m=3):
    """Multi-scale LPIPS loss (scalar), matching LPIPSLoss.forward."""
    x = jnp.transpose(inp_nchw, (0, 2, 3, 1))   # NCHW -> NHWC
    t = jnp.transpose(tgt_nchw, (0, 2, 3, 1))
    losses = []
    for j in range(m):
        if j > 0:
            x = avgpool2(x)
            t = avgpool2(t)
        losses.append(jnp.mean(lpips(x, t, vgg_params, lin_ws)))
    return jnp.sum(jnp.stack(losses))


# ----------------------------------------------------------------------------
# Deterministic synthetic parameter init (shapes match VGG16 + LPIPS lin layers)
# ----------------------------------------------------------------------------
def init_params(key):
    n_convs = sum(len(b) for b in VGG_BLOCKS)
    keys = jax.random.split(key, n_convs + len(LIN_CHANNELS))
    vgg_params = []
    ki = 0
    for block in VGG_BLOCKS:
        for (cin, cout) in block:
            scale = jnp.sqrt(2.0 / (9.0 * cin))
            w = jax.random.normal(keys[ki], (3, 3, cin, cout), jnp.float32) * scale
            if cin == 3:  # pad conv1_1 input channels 3 -> _CIN_PAD with zeros
                w = jnp.pad(w, ((0, 0), (0, 0), (0, _CIN_PAD - 3), (0, 0)))
            w9 = w.reshape(9, w.shape[2], cout).astype(jnp.bfloat16)
            b = jnp.zeros((1, cout), jnp.float32)
            vgg_params.append((w9, b))
            ki += 1
    lin_ws = []
    for c in LIN_CHANNELS:
        # real LPIPS lin weights are non-negative 1x1 convs (no bias)
        lin_ws.append(jnp.abs(jax.random.normal(keys[ki], (c,), jnp.float32)) * 0.05)
        ki += 1
    return vgg_params, lin_ws


def _conv_self_check():
    """Cheap correctness check of the fused conv kernel vs lax.conv (loose bf16 tol)."""
    k = jax.random.PRNGKey(42)
    kx, kw, kb = jax.random.split(k, 3)
    x = jax.random.normal(kx, (1, 8, 8, 8), jnp.float32)
    w9 = (jax.random.normal(kw, (9, 8, 64), jnp.float32) * 0.1).astype(jnp.bfloat16)
    b = jax.random.normal(kb, (1, 64), jnp.float32) * 0.1
    got = conv3x3_relu(x, w9, b).astype(jnp.float32)
    ref = lax.conv_general_dilated(
        x, w9.astype(jnp.float32).reshape(3, 3, 8, 64),
        window_strides=(1, 1), padding="SAME",
        dimension_numbers=("NHWC", "HWIO", "NHWC"))
    ref = jnp.maximum(ref + b.reshape(1, 1, 1, 64), 0.0)
    err = float(jnp.max(jnp.abs(got - ref)))
    assert err < 0.1, f"conv3x3 self-check failed, max abs err {err}"


if __name__ == "__main__":
    key = jax.random.PRNGKey(0)
    kp, kx, kt = jax.random.split(key, 3)
    vgg_params, lin_ws = init_params(kp)

    _conv_self_check()

    # Smallest valid shapes: m=3 scales + 4 VGG max-pools require spatial >= 64.
    B, C, H, W = 2, 3, 64, 64
    x = jax.random.uniform(kx, (B, C, H, W), jnp.float32)
    t = jax.random.uniform(kt, (B, C, H, W), jnp.float32)

    loss = lpips_loss(x, t, vgg_params, lin_ws, m=3)
    jax.block_until_ready(loss)
    assert loss.shape == () and jnp.isfinite(loss)
    print("KERNEL_OK")
</pallas_src>

<mosaic_0001>
module attributes {stable_mosaic.version = 11 : i64} {
  func.func @_conv3x3_kernel(%arg0: i32, %arg1: memref<1x102x8xf32, #tpu.memory_space<vmem>>, %arg2: memref<9x8x64xbf16, #tpu.memory_space<vmem>>, %arg3: memref<1x64xf32, #tpu.memory_space<vmem>>, %arg4: memref<1x80x64xbf16, #tpu.memory_space<vmem>>) attributes {dimension_semantics = [#tpu.dimension_semantics<parallel>], iteration_bounds = array<i64: 1>, scalar_prefetch = 0 : i64, scratch_operands = 0 : i64, tpu.core_type = #tpu.core_type<tc>, window_params = [{transform_indices = @transform_0, window_bounds = array<i64: 1, 102, 8>}, {pipeline_mode = #tpu.pipeline_mode<synchronous>, transform_indices = @transform_1, window_bounds = array<i64: 9, 8, 64>}, {pipeline_mode = #tpu.pipeline_mode<synchronous>, transform_indices = @transform_2, window_bounds = array<i64: 1, 64>}, {transform_indices = @transform_3, window_bounds = array<i64: 1, 80, 64>}]} {
    %cst = arith.constant 0.000000e+00 : f32
    %0 = vector.broadcast %cst : f32 to vector<80x64xf32>
    %c0 = arith.constant 0 : index
    %c0_0 = arith.constant 0 : index
    %c0_1 = arith.constant 0 : index
    %1 = vector.load %arg1[%c0, %c0_0, %c0_1] : memref<1x102x8xf32, #tpu.memory_space<vmem>>, vector<1x80x8xf32>
    %2 = vector.shape_cast %1 : vector<1x80x8xf32> to vector<80x8xf32>
    %3 = arith.truncf %2 : vector<80x8xf32> to vector<80x8xbf16>
    %c0_2 = arith.constant 0 : index
    %c0_3 = arith.constant 0 : index
    %c0_4 = arith.constant 0 : index
    %4 = vector.load %arg2[%c0_2, %c0_3, %c0_4] : memref<9x8x64xbf16, #tpu.memory_space<vmem>>, vector<1x8x64xbf16>
    %5 = vector.shape_cast %4 : vector<1x8x64xbf16> to vector<8x64xbf16>
    %cst_5 = arith.constant dense<0.000000e+00> : vector<80x64xf32>
    %6 = tpu.matmul %3, %5, %cst_5 {dimension_numbers = #tpu.dot_dimension_numbers<[1], [0], [0], [1], [0, 0, 1, 1], [], []>} : vector<80x8xbf16>, vector<8x64xbf16>, vector<80x64xf32> -> vector<80x64xf32>
    %7 = arith.addf %0, %6 : vector<80x64xf32>
    %c0_6 = arith.constant 0 : index
    %c1 = arith.constant 1 : index
    %c0_7 = arith.constant 0 : index
    %8 = vector.load %arg1[%c0_6, %c1, %c0_7] : memref<1x102x8xf32, #tpu.memory_space<vmem>>, vector<1x80x8xf32>
    %9 = vector.shape_cast %8 : vector<1x80x8xf32> to vector<80x8xf32>
    %10 = arith.truncf %9 : vector<80x8xf32> to vector<80x8xbf16>
    %c1_8 = arith.constant 1 : index
    %c0_9 = arith.constant 0 : index
    %c0_10 = arith.constant 0 : index
    %11 = vector.load %arg2[%c1_8, %c0_9, %c0_10] : memref<9x8x64xbf16, #tpu.memory_space<vmem>>, vector<1x8x64xbf16>
    %12 = vector.shape_cast %11 : vector<1x8x64xbf16> to vector<8x64xbf16>
    %cst_11 = arith.constant dense<0.000000e+00> : vector<80x64xf32>
    %13 = tpu.matmul %10, %12, %cst_11 {dimension_numbers = #tpu.dot_dimension_numbers<[1], [0], [0], [1], [0, 0, 1, 1], [], []>} : vector<80x8xbf16>, vector<8x64xbf16>, vector<80x64xf32> -> vector<80x64xf32>
    %14 = arith.addf %7, %13 : vector<80x64xf32>
    %c0_12 = arith.constant 0 : index
    %c2 = arith.constant 2 : index
    %c0_13 = arith.constant 0 : index
    %15 = vector.load %arg1[%c0_12, %c2, %c0_13] : memref<1x102x8xf32, #tpu.memory_space<vmem>>, vector<1x80x8xf32>
    %16 = vector.shape_cast %15 : vector<1x80x8xf32> to vector<80x8xf32>
    %17 = arith.truncf %16 : vector<80x8xf32> to vector<80x8xbf16>
    %c2_14 = arith.constant 2 : index
    %c0_15 = arith.constant 0 : index
    %c0_16 = arith.constant 0 : index
    %18 = vector.load %arg2[%c2_14, %c0_15, %c0_16] : memref<9x8x64xbf16, #tpu.memory_space<vmem>>, vector<1x8x64xbf16>
    %19 = vector.shape_cast %18 : vector<1x8x64xbf16> to vector<8x64xbf16>
    %cst_17 = arith.constant dense<0.000000e+00> : vector<80x64xf32>
    %20 = tpu.matmul %17, %19, %cst_17 {dimension_numbers = #tpu.dot_dimension_numbers<[1], [0], [0], [1], [0, 0, 1, 1], [], []>} : vector<80x8xbf16>, vector<8x64xbf16>, vector<80x64xf32> -> vector<80x64xf32>
    %21 = arith.addf %14, %20 : vector<80x64xf32>
    %c0_18 = arith.constant 0 : index
    %c10 = arith.constant 10 : index
    %c0_19 = arith.constant 0 : index
    %22 = vector.load %arg1[%c0_18, %c10, %c0_19] : memref<1x102x8xf32, #tpu.memory_space<vmem>>, vector<1x80x8xf32>
    %23 = vector.shape_cast %22 : vector<1x80x8xf32> to vector<80x8xf32>
    %24 = arith.truncf %23 : vector<80x8xf32> to vector<80x8xbf16>
    %c3 = arith.constant 3 : index
    %c0_20 = arith.constant 0 : index
    %c0_21 = arith.constant 0 : index
    %25 = vector.load %arg2[%c3, %c0_20, %c0_21] : memref<9x8x64xbf16, #tpu.memory_space<vmem>>, vector<1x8x64xbf16>
    %26 = vector.shape_cast %25 : vector<1x8x64xbf16> to vector<8x64xbf16>
    %cst_22 = arith.constant dense<0.000000e+00> : vector<80x64xf32>
    %27 = tpu.matmul %24, %26, %cst_22 {dimension_numbers = #tpu.dot_dimension_numbers<[1], [0], [0], [1], [0, 0, 1, 1], [], []>} : vector<80x8xbf16>, vector<8x64xbf16>, vector<80x64xf32> -> vector<80x64xf32>
    %28 = arith.addf %21, %27 : vector<80x64xf32>
    %c0_23 = arith.constant 0 : index
    %c11 = arith.constant 11 : index
    %c0_24 = arith.constant 0 : index
    %29 = vector.load %arg1[%c0_23, %c11, %c0_24] : memref<1x102x8xf32, #tpu.memory_space<vmem>>, vector<1x80x8xf32>
    %30 = vector.shape_cast %29 : vector<1x80x8xf32> to vector<80x8xf32>
    %31 = arith.truncf %30 : vector<80x8xf32> to vector<80x8xbf16>
    %c4 = arith.constant 4 : index
    %c0_25 = arith.constant 0 : index
    %c0_26 = arith.constant 0 : index
    %32 = vector.load %arg2[%c4, %c0_25, %c0_26] : memref<9x8x64xbf16, #tpu.memory_space<vmem>>, vector<1x8x64xbf16>
    %33 = vector.shape_cast %32 : vector<1x8x64xbf16> to vector<8x64xbf16>
    %cst_27 = arith.constant dense<0.000000e+00> : vector<80x64xf32>
    %34 = tpu.matmul %31, %33, %cst_27 {dimension_numbers = #tpu.dot_dimension_numbers<[1], [0], [0], [1], [0, 0, 1, 1], [], []>} : vector<80x8xbf16>, vector<8x64xbf16>, vector<80x64xf32> -> vector<80x64xf32>
    %35 = arith.addf %28, %34 : vector<80x64xf32>
    %c0_28 = arith.constant 0 : index
    %c12 = arith.constant 12 : index
    %c0_29 = arith.constant 0 : index
    %36 = vector.load %arg1[%c0_28, %c12, %c0_29] : memref<1x102x8xf32, #tpu.memory_space<vmem>>, vector<1x80x8xf32>
    %37 = vector.shape_cast %36 : vector<1x80x8xf32> to vector<80x8xf32>
    %38 = arith.truncf %37 : vector<80x8xf32> to vector<80x8xbf16>
    %c5 = arith.constant 5 : index
    %c0_30 = arith.constant 0 : index
    %c0_31 = arith.constant 0 : index
    %39 = vector.load %arg2[%c5, %c0_30, %c0_31] : memref<9x8x64xbf16, #tpu.memory_space<vmem>>, vector<1x8x64xbf16>
    %40 = vector.shape_cast %39 : vector<1x8x64xbf16> to vector<8x64xbf16>
    %cst_32 = arith.constant dense<0.000000e+00> : vector<80x64xf32>
    %41 = tpu.matmul %38, %40, %cst_32 {dimension_numbers = #tpu.dot_dimension_numbers<[1], [0], [0], [1], [0, 0, 1, 1], [], []>} : vector<80x8xbf16>, vector<8x64xbf16>, vector<80x64xf32> -> vector<80x64xf32>
    %42 = arith.addf %35, %41 : vector<80x64xf32>
    %c0_33 = arith.constant 0 : index
    %c20 = arith.constant 20 : index
    %c0_34 = arith.constant 0 : index
    %43 = vector.load %arg1[%c0_33, %c20, %c0_34] : memref<1x102x8xf32, #tpu.memory_space<vmem>>, vector<1x80x8xf32>
    %44 = vector.shape_cast %43 : vector<1x80x8xf32> to vector<80x8xf32>
    %45 = arith.truncf %44 : vector<80x8xf32> to vector<80x8xbf16>
    %c6 = arith.constant 6 : index
    %c0_35 = arith.constant 0 : index
    %c0_36 = arith.constant 0 : index
    %46 = vector.load %arg2[%c6, %c0_35, %c0_36] : memref<9x8x64xbf16, #tpu.memory_space<vmem>>, vector<1x8x64xbf16>
    %47 = vector.shape_cast %46 : vector<1x8x64xbf16> to vector<8x64xbf16>
    %cst_37 = arith.constant dense<0.000000e+00> : vector<80x64xf32>
    %48 = tpu.matmul %45, %47, %cst_37 {dimension_numbers = #tpu.dot_dimension_numbers<[1], [0], [0], [1], [0, 0, 1, 1], [], []>} : vector<80x8xbf16>, vector<8x64xbf16>, vector<80x64xf32> -> vector<80x64xf32>
    %49 = arith.addf %42, %48 : vector<80x64xf32>
    %c0_38 = arith.constant 0 : index
    %c21 = arith.constant 21 : index
    %c0_39 = arith.constant 0 : index
    %50 = vector.load %arg1[%c0_38, %c21, %c0_39] : memref<1x102x8xf32, #tpu.memory_space<vmem>>, vector<1x80x8xf32>
    %51 = vector.shape_cast %50 : vector<1x80x8xf32> to vector<80x8xf32>
    %52 = arith.truncf %51 : vector<80x8xf32> to vector<80x8xbf16>
    %c7 = arith.constant 7 : index
    %c0_40 = arith.constant 0 : index
    %c0_41 = arith.constant 0 : index
    %53 = vector.load %arg2[%c7, %c0_40, %c0_41] : memref<9x8x64xbf16, #tpu.memory_space<vmem>>, vector<1x8x64xbf16>
    %54 = vector.shape_cast %53 : vector<1x8x64xbf16> to vector<8x64xbf16>
    %cst_42 = arith.constant dense<0.000000e+00> : vector<80x64xf32>
    %55 = tpu.matmul %52, %54, %cst_42 {dimension_numbers = #tpu.dot_dimension_numbers<[1], [0], [0], [1], [0, 0, 1, 1], [], []>} : vector<80x8xbf16>, vector<8x64xbf16>, vector<80x64xf32> -> vector<80x64xf32>
    %56 = arith.addf %49, %55 : vector<80x64xf32>
    %c0_43 = arith.constant 0 : index
    %c22 = arith.constant 22 : index
    %c0_44 = arith.constant 0 : index
    %57 = vector.load %arg1[%c0_43, %c22, %c0_44] : memref<1x102x8xf32, #tpu.memory_space<vmem>>, vector<1x80x8xf32>
    %58 = vector.shape_cast %57 : vector<1x80x8xf32> to vector<80x8xf32>
    %59 = arith.truncf %58 : vector<80x8xf32> to vector<80x8xbf16>
    %c8 = arith.constant 8 : index
    %c0_45 = arith.constant 0 : index
    %c0_46 = arith.constant 0 : index
    %60 = vector.load %arg2[%c8, %c0_45, %c0_46] : memref<9x8x64xbf16, #tpu.memory_space<vmem>>, vector<1x8x64xbf16>
    %61 = vector.shape_cast %60 : vector<1x8x64xbf16> to vector<8x64xbf16>
    %cst_47 = arith.constant dense<0.000000e+00> : vector<80x64xf32>
    %62 = tpu.matmul %59, %61, %cst_47 {dimension_numbers = #tpu.dot_dimension_numbers<[1], [0], [0], [1], [0, 0, 1, 1], [], []>} : vector<80x8xbf16>, vector<8x64xbf16>, vector<80x64xf32> -> vector<80x64xf32>
    %63 = arith.addf %56, %62 : vector<80x64xf32>
    %c0_48 = arith.constant 0 : index
    %c0_49 = arith.constant 0 : index
    %64 = vector.load %arg3[%c0_48, %c0_49] : memref<1x64xf32, #tpu.memory_space<vmem>>, vector<1x64xf32>
    %65 = vector.broadcast %64 : vector<1x64xf32> to vector<80x64xf32>
    %66 = arith.addf %63, %65 : vector<80x64xf32>
    %cst_50 = arith.constant 0.000000e+00 : f32
    %67 = vector.broadcast %cst_50 : f32 to vector<80x64xf32>
    %68 = arith.maximumf %66, %67 : vector<80x64xf32>
    %69 = arith.truncf %68 : vector<80x64xf32> to vector<80x64xbf16>
    %c0_51 = arith.constant 0 : index
    %c0_52 = arith.constant 0 : index
    %c0_53 = arith.constant 0 : index
    %70 = vector.load %arg4[%c0_51, %c0_52, %c0_53] : memref<1x80x64xbf16, #tpu.memory_space<vmem>>, vector<1x80x64xbf16>
    %71 = vector.shape_cast %70 : vector<1x80x64xbf16> to vector<80x64xbf16>
    %72 = vector.shape_cast %69 : vector<80x64xbf16> to vector<1x80x64xbf16>
    tpu.vector_store %arg4[%c0_51, %c0_52, %c0_53], %72 {strides = array<i32>} : memref<1x80x64xbf16, #tpu.memory_space<vmem>>, vector<1x80x64xbf16>,
    return
  }
  func.func @transform_0(%arg0: i32) -> (i32, i32, i32) {
    %c0_i32 = arith.constant 0 : i32
    %c0_i32_0 = arith.constant 0 : i32
    %c0_i32_1 = arith.constant 0 : i32
    return %arg0, %c0_i32, %c0_i32_0 : i32, i32, i32
  }
  func.func @transform_1(%arg0: i32) -> (i32, i32, i32) {
    %c0_i32 = arith.constant 0 : i32
    %c0_i32_0 = arith.constant 0 : i32
    %c0_i32_1 = arith.constant 0 : i32
    %c0_i32_2 = arith.constant 0 : i32
    return %c0_i32, %c0_i32_0, %c0_i32_1 : i32, i32, i32
  }
  func.func @transform_2(%arg0: i32) -> (i32, i32) {
    %c0_i32 = arith.constant 0 : i32
    %c0_i32_0 = arith.constant 0 : i32
    %c0_i32_1 = arith.constant 0 : i32
    return %c0_i32, %c0_i32_0 : i32, i32
  }
  func.func @transform_3(%arg0: i32) -> (i32, i32, i32) {
    %c0_i32 = arith.constant 0 : i32
    %c0_i32_0 = arith.constant 0 : i32
    %c0_i32_1 = arith.constant 0 : i32
    return %arg0, %c0_i32, %c0_i32_0 : i32, i32, i32
  }
}

</mosaic_0001>

<llo_original>
// kernel: tpu_custom_call.1
$region0: #{tpu_custom_call.1}
  #allocation0 [shape = 'u32[]', space=smem, size = 0x4, offset = 0x4, fixed_abs, tag = 'smem constant byte address 0x4 - core index']
  #allocation1 [shape = 'u32[144,128]{1,0:T(1,128)}', space=vmem, size = 0x12000, scoped, tag = 'internal scratch']
  %s0 = inlined_call_operand.vmem [shape: f32[1,102,8], index: 0, kind: input, shape index: {}]
  %s1 = inlined_call_operand.vmem [shape: bf16[9,8,64], index: 1, kind: input, shape index: {}]
  %s2 = inlined_call_operand.vmem [shape: f32[1,64], index: 2, kind: input, shape index: {}]
  %s3 = inlined_call_operand.vmem [shape: bf16[1,80,64], index: 3, kind: output, shape index: {}]
  %s4 = sld [smem:[#allocation0]]
  $region22: #{tpu_custom_call.1} parent=0
    _
  %s6 = ssub.s32 1, %s4
  %s7 = scalar_select 0, %s6, %s4
  // Predicated region
  $region2: #{tpu_custom_call.1} parent=0 // pred_check
    _
  $region3: #{tpu_custom_call.1} parent=0 // pred_check_branch
    %9 = sbr.rel (0) target = $region5
  $region4: #{tpu_custom_call.1} parent=0 // pred_region
    _
  $region5: #{tpu_custom_call.1} parent=0 // pred_fallthru
    _
  // Predicated region
  $region6: #{tpu_custom_call.1} parent=0 // pred_check
    _
  $region7: #{tpu_custom_call.1} parent=0 // pred_check_branch
    %11 = sbr.rel (0) target = $region9
  $region8: #{tpu_custom_call.1} parent=0 // pred_region
    _
  $region9: #{tpu_custom_call.1} parent=0 // pred_fallthru
    _
  // Predicated region
  $region10: #{tpu_custom_call.1} parent=0 // pred_check
    _
  $region11: #{tpu_custom_call.1} parent=0 // pred_check_branch
    %13 = sbr.rel (0) target = $region13
  $region12: #{tpu_custom_call.1} parent=0 // pred_region
    _
  $region13: #{tpu_custom_call.1} parent=0 // pred_fallthru
    _
  %v15 = vld [vmem:[%s0] sm:$0xff]
  %v16 = vld [vmem:[%s0 + $0x8] sm:$0xff]
  %v17 = vld [vmem:[%s0 + $0x10] sm:$0xff]
  %v18 = vld [vmem:[%s0 + $0x18] sm:$0xff]
  %v19 = vld [vmem:[%s0 + $0x20] sm:$0xff]
  %v20 = vld [vmem:[%s0 + $0x28] sm:$0xff]
  %v21 = vld [vmem:[%s0 + $0x30] sm:$0xff]
  %v22 = vld [vmem:[%s0 + $0x38] sm:$0xff]
  %v23 = vld [vmem:[%s0 + $0x40] sm:$0xff]
  %v24 = vld [vmem:[%s0 + $0x48] sm:$0xff]
  %v25 = vpack.c.bf16 %v16, %v15
  %v26 = vpack.c.bf16 %v18, %v17
  %v27 = vpack.c.bf16 %v20, %v19
  %v28 = vpack.c.bf16 %v22, %v21
  %v29 = vpack.c.bf16 %v24, %v23
  %v30 = vld [vmem:[%s1] sm:$0xf]
  %v31 = vld [vmem:[%s0 + $0x1] sm:$0xff]
  %v32 = vld [vmem:[%s0 + $0x9] sm:$0xff]
  %v33 = vld [vmem:[%s0 + $0x11] sm:$0xff]
  %v34 = vld [vmem:[%s0 + $0x19] sm:$0xff]
  %v35 = vld [vmem:[%s0 + $0x21] sm:$0xff]
  %v36 = vld [vmem:[%s0 + $0x29] sm:$0xff]
  %v37 = vld [vmem:[%s0 + $0x31] sm:$0xff]
  %v38 = vld [vmem:[%s0 + $0x39] sm:$0xff]
  %v39 = vld [vmem:[%s0 + $0x41] sm:$0xff]
  %v40 = vld [vmem:[%s0 + $0x49] sm:$0xff]
  %v41 = vpack.c.bf16 %v32, %v31
  %v42 = vpack.c.bf16 %v34, %v33
  %v43 = vpack.c.bf16 %v36, %v35
  %v44 = vpack.c.bf16 %v38, %v37
  %v45 = vpack.c.bf16 %v40, %v39
  %s46 = scalar_lea.vmem %s1, 4
  %v47 = vld [vmem:[%s46] sm:$0xf]
  %vm48 = vcmask 64512
  %v50 = vsel %vm48, %v41, 0
  %v53 = vsel %vm48, %v42, 0
  %v56 = vsel %vm48, %v43, 0
  %v59 = vsel %vm48, %v44, 0
  %v62 = vsel %vm48, %v45, 0
  %vm64 = vcmask 1043456
  %v66 = vsel %vm64, %v47, 0
  %68 = vmatprep.subr.bf16.mxu0 0
  %69 = vmatpush1.bf16.msra.mxu0 %v66
  %70 = vmatprep.subr.bf16.mxu0 0
  %71 = vmatpush1.bf16.msra.mxu0 0
  %72 = vmatprep.subr.bf16.mxu0 0
  %73 = vmatpush1.bf16.msra.mxu0 0
  %74 = vmatprep.subr.bf16.mxu0 0
  %75 = vmatpush1.bf16.msra.mxu0 0
  %76 = vmatprep.subr.bf16.mxu0 0
  %77 = vmatpush1.bf16.msra.mxu0 0
  %78 = vmatprep.subr.bf16.mxu0 0
  %79 = vmatpush1.bf16.msra.mxu0 0
  %80 = vmatprep.subr.bf16.mxu0 0
  %81 = vmatpush1.bf16.msra.mxu0 0
  %82 = vmatprep.subr.bf16.mxu0 0
  %83 = vmatpush1.bf16.msra.mxu0 0
  %84 = vmatprep.subr.bf16.mxu0 0
  %85 = vmatpush1.bf16.msra.mxu0 0
  %86 = vmatprep.subr.bf16.mxu0 0
  %87 = vmatpush1.bf16.msra.mxu0 0
  %88 = vmatprep.subr.bf16.mxu0 0
  %89 = vmatpush1.bf16.msra.mxu0 0
  %90 = vmatprep.subr.bf16.mxu0 0
  %91 = vmatpush1.bf16.msra.mxu0 0
  %92 = vmatprep.subr.bf16.mxu0 0
  %93 = vmatpush1.bf16.msra.mxu0 0
  %94 = vmatprep.subr.bf16.mxu0 0
  %95 = vmatpush1.bf16.msra.mxu0 0
  %96 = vmatprep.subr.bf16.mxu0 0
  %97 = vmatpush1.bf16.msra.mxu0 0
  %98 = vmatprep.subr.bf16.mxu0 0
  %99 = vmatpush1.bf16.msra.mxu0 0
  %100 = vmatprep.mubr.bf16.mxu0 0
  %101 = vmatmul.mubr.bf16.gmra.mrb[0].mxu0 %v50
  %v102 = vpop.f32.mrb[0].mxu0
  %v103 = vadd.f32 0.0, %v102
  %v104 = vpop.f32.mrb[0].mxu0
  %v105 = vpop.f32.mrb[0].mxu0
  %v106 = vadd.f32 0.0, %v105
  %v107 = vpop.f32.mrb[0].mxu0
  %108 = vmatprep.mubr.bf16.mxu0 0
  %109 = vmatmul.mubr.bf16.gmra.mrb[0].mxu0 %v53
  %v110 = vpop.f32.mrb[0].mxu0
  %v111 = vadd.f32 0.0, %v110
  %v112 = vpop.f32.mrb[0].mxu0
  %v113 = vpop.f32.mrb[0].mxu0
  %v114 = vadd.f32 0.0, %v113
  %v115 = vpop.f32.mrb[0].mxu0
  %116 = vmatprep.mubr.bf16.mxu0 0
  %117 = vmatmul.mubr.bf16.gmra.mrb[0].mxu0 %v56
  %v118 = vpop.f32.mrb[0].mxu0
  %v119 = vadd.f32 0.0, %v118
  %v120 = vpop.f32.mrb[0].mxu0
  %v121 = vpop.f32.mrb[0].mxu0
  %v122 = vadd.f32 0.0, %v121
  %v123 = vpop.f32.mrb[0].mxu0
  %124 = vmatprep.mubr.bf16.mxu0 0
  %125 = vmatmul.mubr.bf16.gmra.mrb[0].mxu0 %v59
  %v126 = vpop.f32.mrb[0].mxu0
  %v127 = vadd.f32 0.0, %v126
  %v128 = vpop.f32.mrb[0].mxu0
  %v129 = vpop.f32.mrb[0].mxu0
  %v130 = vadd.f32 0.0, %v129
  %v131 = vpop.f32.mrb[0].mxu0
  %132 = vmatprep.mubr.bf16.mxu0 0
  %133 = vmatmul.mubr.bf16.gmra.mrb[0].mxu0 %v62
  %v134 = vpop.f32.mrb[0].mxu0
  %v135 = vadd.f32 0.0, %v134
  %v136 = vpop.f32.mrb[0].mxu0
  %v137 = vpop.f32.mrb[0].mxu0
  %v138 = vadd.f32 0.0, %v137
  %v139 = vpop.f32.mrb[0].mxu0
  %140 = vdwg.mxu0
  %v142 = vsel %vm48, %v25, 0
  %v145 = vsel %vm48, %v26, 0
  %v148 = vsel %vm48, %v27, 0
  %v151 = vsel %vm48, %v28, 0
  %v154 = vsel %vm48, %v29, 0
  %v157 = vsel %vm64, %v30, 0
  %159 = vmatprep.subr.bf16.mxu0 0
  %160 = vmatpush1.bf16.msra.mxu0 %v157
  %161 = vmatprep.subr.bf16.mxu0 0
  %162 = vmatpush1.bf16.msra.mxu0 0
  %163 = vmatprep.subr.bf16.mxu0 0
  %164 = vmatpush1.bf16.msra.mxu0 0
  %165 = vmatprep.subr.bf16.mxu0 0
  %166 = vmatpush1.bf16.msra.mxu0 0
  %167 = vmatprep.subr.bf16.mxu0 0
  %168 = vmatpush1.bf16.msra.mxu0 0
  %169 = vmatprep.subr.bf16.mxu0 0
  %170 = vmatpush1.bf16.msra.mxu0 0
  %171 = vmatprep.subr.bf16.mxu0 0
  %172 = vmatpush1.bf16.msra.mxu0 0
  %173 = vmatprep.subr.bf16.mxu0 0
  %174 = vmatpush1.bf16.msra.mxu0 0
  %175 = vmatprep.subr.bf16.mxu0 0
  %176 = vmatpush1.bf16.msra.mxu0 0
  %177 = vmatprep.subr.bf16.mxu0 0
  %178 = vmatpush1.bf16.msra.mxu0 0
  %179 = vmatprep.subr.bf16.mxu0 0
  %180 = vmatpush1.bf16.msra.mxu0 0
  %181 = vmatprep.subr.bf16.mxu0 0
  %182 = vmatpush1.bf16.msra.mxu0 0
  %183 = vmatprep.subr.bf16.mxu0 0
  %184 = vmatpush1.bf16.msra.mxu0 0
  %185 = vmatprep.subr.bf16.mxu0 0
  %186 = vmatpush1.bf16.msra.mxu0 0
  %187 = vmatprep.subr.bf16.mxu0 0
  %188 = vmatpush1.bf16.msra.mxu0 0
  %189 = vmatprep.subr.bf16.mxu0 0
  %190 = vmatpush1.bf16.msra.mxu0 0
  %191 = vmatprep.mubr.bf16.mxu0 0
  %192 = vmatmul.mubr.bf16.gmra.mrb[0].mxu0 %v142
  %v193 = vpop.f32.mrb[0].mxu0
  %v194 = vadd.f32 %v103, %v193
  %v195 = vpop.f32.mrb[0].mxu0
  %v196 = vpop.f32.mrb[0].mxu0
  %v197 = vadd.f32 %v106, %v196
  %v198 = vpop.f32.mrb[0].mxu0
  %199 = vmatprep.mubr.bf16.mxu0 0
  %200 = vmatmul.mubr.bf16.gmra.mrb[0].mxu0 %v145
  %v201 = vpop.f32.mrb[0].mxu0
  %v202 = vadd.f32 %v111, %v201
  %v203 = vpop.f32.mrb[0].mxu0
  %v204 = vpop.f32.mrb[0].mxu0
  %v205 = vadd.f32 %v114, %v204
  %v206 = vpop.f32.mrb[0].mxu0
  %207 = vmatprep.mubr.bf16.mxu0 0
  %208 = vmatmul.mubr.bf16.gmra.mrb[0].mxu0 %v148
  %v209 = vpop.f32.mrb[0].mxu0
  %v210 = vadd.f32 %v119, %v209
  %v211 = vpop.f32.mrb[0].mxu0
  %v212 = vpop.f32.mrb[0].mxu0
  %v213 = vadd.f32 %v122, %v212
  %v214 = vpop.f32.mrb[0].mxu0
  %215 = vmatprep.mubr.bf16.mxu0 0
  %216 = vmatmul.mubr.bf16.gmra.mrb[0].mxu0 %v151
  %v217 = vpop.f32.mrb[0].mxu0
  %v218 = vadd.f32 %v127, %v217
  %v219 = vpop.f32.mrb[0].mxu0
  %v220 = vpop.f32.mrb[0].mxu0
  %v221 = vadd.f32 %v130, %v220
  %v222 = vpop.f32.mrb[0].mxu0
  %223 = vmatprep.mubr.bf16.mxu0 0
  %224 = vmatmul.mubr.bf16.gmra.mrb[0].mxu0 %v154
  %v225 = vpop.f32.mrb[0].mxu0
  %v226 = vadd.f32 %v135, %v225
  %v227 = vpop.f32.mrb[0].mxu0
  %v228 = vpop.f32.mrb[0].mxu0
  %v229 = vadd.f32 %v138, %v228
  %v230 = vpop.f32.mrb[0].mxu0
  %231 = vdwg.mxu0
  %v232 = vld [vmem:[%s0 + $0x2] sm:$0xff]
  %v233 = vld [vmem:[%s0 + $0xa] sm:$0xff]
  %v234 = vld [vmem:[%s0 + $0x12] sm:$0xff]
  %v235 = vld [vmem:[%s0 + $0x1a] sm:$0xff]
  %v236 = vld [vmem:[%s0 + $0x22] sm:$0xff]
  %v237 = vld [vmem:[%s0 + $0x2a] sm:$0xff]
  %v238 = vld [vmem:[%s0 + $0x32] sm:$0xff]
  %v239 = vld [vmem:[%s0 + $0x3a] sm:$0xff]
  %v240 = vld [vmem:[%s0 + $0x42] sm:$0xff]
  %v241 = vld [vmem:[%s0 + $0x4a] sm:$0xff]
  %v242 = vpack.c.bf16 %v233, %v232
  %v243 = vpack.c.bf16 %v235, %v234
  %v244 = vpack.c.bf16 %v237, %v236
  %v245 = vpack.c.bf16 %v239, %v238
  %v246 = vpack.c.bf16 %v241, %v240
  %s247 = scalar_lea.vmem %s1, 8
  %v248 = vld [vmem:[%s247] sm:$0xf]
  %v250 = vsel %vm48, %v242, 0
  %v253 = vsel %vm48, %v243, 0
  %v256 = vsel %vm48, %v244, 0
  %v259 = vsel %vm48, %v245, 0
  %v262 = vsel %vm48, %v246, 0
  %v265 = vsel %vm64, %v248, 0
  %267 = vmatprep.subr.bf16.mxu0 0
  %268 = vmatpush1.bf16.msra.mxu0 %v265
  %269 = vmatprep.subr.bf16.mxu0 0
  %270 = vmatpush1.bf16.msra.mxu0 0
  %271 = vmatprep.subr.bf16.mxu0 0
  %272 = vmatpush1.bf16.msra.mxu0 0
  %273 = vmatprep.subr.bf16.mxu0 0
  %274 = vmatpush1.bf16.msra.mxu0 0
  %275 = vmatprep.subr.bf16.mxu0 0
  %276 = vmatpush1.bf16.msra.mxu0 0
  %277 = vmatprep.subr.bf16.mxu0 0
  %278 = vmatpush1.bf16.msra.mxu0 0
  %279 = vmatprep.subr.bf16.mxu0 0
  %280 = vmatpush1.bf16.msra.mxu0 0
  %281 = vmatprep.subr.bf16.mxu0 0
  %282 = vmatpush1.bf16.msra.mxu0 0
  %283 = vmatprep.subr.bf16.mxu0 0
  %284 = vmatpush1.bf16.msra.mxu0 0
  %285 = vmatprep.subr.bf16.mxu0 0
  %286 = vmatpush1.bf16.msra.mxu0 0
  %287 = vmatprep.subr.bf16.mxu0 0
  %288 = vmatpush1.bf16.msra.mxu0 0
  %289 = vmatprep.subr.bf16.mxu0 0
  %290 = vmatpush1.bf16.msra.mxu0 0
  %291 = vmatprep.subr.bf16.mxu0 0
  %292 = vmatpush1.bf16.msra.mxu0 0
  %293 = vmatprep.subr.bf16.mxu0 0
  %294 = vmatpush1.bf16.msra.mxu0 0
  %295 = vmatprep.subr.bf16.mxu0 0
  %296 = vmatpush1.bf16.msra.mxu0 0
  %297 = vmatprep.subr.bf16.mxu0 0
  %298 = vmatpush1.bf16.msra.mxu0 0
  %299 = vmatprep.mubr.bf16.mxu0 0
  %300 = vmatmul.mubr.bf16.gmra.mrb[0].mxu0 %v250
  %v301 = vpop.f32.mrb[0].mxu0
  %v302 = vadd.f32 0.0, %v301
  %v303 = vpop.f32.mrb[0].mxu0
  %v304 = vpop.f32.mrb[0].mxu0
  %v305 = vadd.f32 0.0, %v304
  %v306 = vpop.f32.mrb[0].mxu0
  %307 = vmatprep.mubr.bf16.mxu0 0
  %308 = vmatmul.mubr.bf16.gmra.mrb[0].mxu0 %v253
  %v309 = vpop.f32.mrb[0].mxu0
  %v310 = vadd.f32 0.0, %v309
  %v311 = vpop.f32.mrb[0].mxu0
  %v312 = vpop.f32.mrb[0].mxu0
  %v313 = vadd.f32 0.0, %v312
  %v314 = vpop.f32.mrb[0].mxu0
  %315 = vmatprep.mubr.bf16.mxu0 0
  %316 = vmatmul.mubr.bf16.gmra.mrb[0].mxu0 %v256
  %v317 = vpop.f32.mrb[0].mxu0
  %v318 = vadd.f32 0.0, %v317
  %v319 = vpop.f32.mrb[0].mxu0
  %v320 = vpop.f32.mrb[0].mxu0
  %v321 = vadd.f32 0.0, %v320
  %v322 = vpop.f32.mrb[0].mxu0
  %323 = vmatprep.mubr.bf16.mxu0 0
  %324 = vmatmul.mubr.bf16.gmra.mrb[0].mxu0 %v259
  %v325 = vpop.f32.mrb[0].mxu0
  %v326 = vadd.f32 0.0, %v325
  %v327 = vpop.f32.mrb[0].mxu0
  %v328 = vpop.f32.mrb[0].mxu0
  %v329 = vadd.f32 0.0, %v328
  %v330 = vpop.f32.mrb[0].mxu0
  %331 = vmatprep.mubr.bf16.mxu0 0
  %332 = vmatmul.mubr.bf16.gmra.mrb[0].mxu0 %v262
  %v333 = vpop.f32.mrb[0].mxu0
  %v334 = vadd.f32 0.0, %v333
  %v335 = vpop.f32.mrb[0].mxu0
  %v336 = vpop.f32.mrb[0].mxu0
  %v337 = vadd.f32 0.0, %v336
  %v338 = vpop.f32.mrb[0].mxu0
  %339 = vdwg.mxu0
  %v340 = vadd.f32 %v194, %v302
  %v341 = vadd.f32 %v197, %v305
  %v342 = vadd.f32 %v202, %v310
  %v343 = vadd.f32 %v205, %v313
  %v344 = vadd.f32 %v210, %v318
  %v345 = vadd.f32 %v213, %v321
  %v346 = vadd.f32 %v218, %v326
  %v347 = vadd.f32 %v221, %v329
  %v348 = vadd.f32 %v226, %v334
  %v349 = vadd.f32 %v229, %v337
  %v350 = vld [vmem:[%s0 + $0xa] sm:$0xff]
  %v351 = vld [vmem:[%s0 + $0x12] sm:$0xff]
  %v352 = vld [vmem:[%s0 + $0x1a] sm:$0xff]
  %v353 = vld [vmem:[%s0 + $0x22] sm:$0xff]
  %v354 = vld [vmem:[%s0 + $0x2a] sm:$0xff]
  %v355 = vld [vmem:[%s0 + $0x32] sm:$0xff]
  %v356 = vld [vmem:[%s0 + $0x3a] sm:$0xff]
  %v357 = vld [vmem:[%s0 + $0x42] sm:$0xff]
  %v358 = vld [vmem:[%s0 + $0x4a] sm:$0xff]
  %v359 = vld [vmem:[%s0 + $0x52] sm:$0xff]
  %v360 = vpack.c.bf16 %v351, %v350
  %v361 = vpack.c.bf16 %v353, %v352
  %v362 = vpack.c.bf16 %v355, %v354
  %v363 = vpack.c.bf16 %v357, %v356
  %v364 = vpack.c.bf16 %v359, %v358
  %s365 = scalar_lea.vmem %s1, 12
  %v366 = vld [vmem:[%s365] sm:$0xf]
  %v368 = vsel %vm48, %v360, 0
  %v371 = vsel %vm48, %v361, 0
  %v374 = vsel %vm48, %v362, 0
  %v377 = vsel %vm48, %v363, 0
  %v380 = vsel %vm48, %v364, 0
  %v383 = vsel %vm64, %v366, 0
  %385 = vmatprep.subr.bf16.mxu0 0
  %386 = vmatpush1.bf16.msra.mxu0 %v383
  %387 = vmatprep.subr.bf16.mxu0 0
  %388 = vmatpush1.bf16.msra.mxu0 0
  %389 = vmatprep.subr.bf16.mxu0 0
  %390 = vmatpush1.bf16.msra.mxu0 0
  %391 = vmatprep.subr.bf16.mxu0 0
  %392 = vmatpush1.bf16.msra.mxu0 0
  %393 = vmatprep.subr.bf16.mxu0 0
  %394 = vmatpush1.bf16.msra.mxu0 0
  %395 = vmatprep.subr.bf16.mxu0 0
  %396 = vmatpush1.bf16.msra.mxu0 0
  %397 = vmatprep.subr.bf16.mxu0 0
  %398 = vmatpush1.bf16.msra.mxu0 0
  %399 = vmatprep.subr.bf16.mxu0 0
  %400 = vmatpush1.bf16.msra.mxu0 0
  %401 = vmatprep.subr.bf16.mxu0 0
  %402 = vmatpush1.bf16.msra.mxu0 0
  %403 = vmatprep.subr.bf16.mxu0 0
  %404 = vmatpush1.bf16.msra.mxu0 0
  %405 = vmatprep.subr.bf16.mxu0 0
  %406 = vmatpush1.bf16.msra.mxu0 0
  %407 = vmatprep.subr.bf16.mxu0 0
  %408 = vmatpush1.bf16.msra.mxu0 0
  %409 = vmatprep.subr.bf16.mxu0 0
  %410 = vmatpush1.bf16.msra.mxu0 0
  %411 = vmatprep.subr.bf16.mxu0 0
  %412 = vmatpush1.bf16.msra.mxu0 0
  %413 = vmatprep.subr.bf16.mxu0 0
  %414 = vmatpush1.bf16.msra.mxu0 0
  %415 = vmatprep.subr.bf16.mxu0 0
  %416 = vmatpush1.bf16.msra.mxu0 0
  %417 = vmatprep.mubr.bf16.mxu0 0
  %418 = vmatmul.mubr.bf16.gmra.mrb[0].mxu0 %v368
  %v419 = vpop.f32.mrb[0].mxu0
  %v420 = vadd.f32 0.0, %v419
  %v421 = vpop.f32.mrb[0].mxu0
  %v422 = vpop.f32.mrb[0].mxu0
  %v423 = vadd.f32 0.0, %v422
  %v424 = vpop.f32.mrb[0].mxu0
  %425 = vmatprep.mubr.bf16.mxu0 0
  %426 = vmatmul.mubr.bf16.gmra.mrb[0].mxu0 %v371
  %v427 = vpop.f32.mrb[0].mxu0
  %v428 = vadd.f32 0.0, %v427
  %v429 = vpop.f32.mrb[0].mxu0
  %v430 = vpop.f32.mrb[0].mxu0
  %v431 = vadd.f32 0.0, %v430
  %v432 = vpop.f32.mrb[0].mxu0
  %433 = vmatprep.mubr.bf16.mxu0 0
  %434 = vmatmul.mubr.bf16.gmra.mrb[0].mxu0 %v374
  %v435 = vpop.f32.mrb[0].mxu0
  %v436 = vadd.f32 0.0, %v435
  %v437 = vpop.f32.mrb[0].mxu0
  %v438 = vpop.f32.mrb[0].mxu0
  %v439 = vadd.f32 0.0, %v438
  %v440 = vpop.f32.mrb[0].mxu0
  %441 = vmatprep.mubr.bf16.mxu0 0
  %442 = vmatmul.mubr.bf16.gmra.mrb[0].mxu0 %v377
  %v443 = vpop.f32.mrb[0].mxu0
  %v444 = vadd.f32 0.0, %v443
  %v445 = vpop.f32.mrb[0].mxu0
  %v446 = vpop.f32.mrb[0].mxu0
  %v447 = vadd.f32 0.0, %v446
  %v448 = vpop.f32.mrb[0].mxu0
  %449 = vmatprep.mubr.bf16.mxu0 0
  %450 = vmatmul.mubr.bf16.gmra.mrb[0].mxu0 %v380
  %v451 = vpop.f32.mrb[0].mxu0
  %v452 = vadd.f32 0.0, %v451
  %v453 = vpop.f32.mrb[0].mxu0
  %v454 = vpop.f32.mrb[0].mxu0
  %v455 = vadd.f32 0.0, %v454
  %v456 = vpop.f32.mrb[0].mxu0
  %457 = vdwg.mxu0
  %v458 = vadd.f32 %v340, %v420
  %v459 = vadd.f32 %v341, %v423
  %v460 = vadd.f32 %v342, %v428
  %v461 = vadd.f32 %v343, %v431
  %v462 = vadd.f32 %v344, %v436
  %v463 = vadd.f32 %v345, %v439
  %v464 = vadd.f32 %v346, %v444
  %v465 = vadd.f32 %v347, %v447
  %v466 = vadd.f32 %v348, %v452
  %v467 = vadd.f32 %v349, %v455
  %v468 = vld [vmem:[%s0 + $0xb] sm:$0xff]
  %v469 = vld [vmem:[%s0 + $0x13] sm:$0xff]
  %v470 = vld [vmem:[%s0 + $0x1b] sm:$0xff]
  %v471 = vld [vmem:[%s0 + $0x23] sm:$0xff]
  %v472 = vld [vmem:[%s0 + $0x2b] sm:$0xff]
  %v473 = vld [vmem:[%s0 + $0x33] sm:$0xff]
  %v474 = vld [vmem:[%s0 + $0x3b] sm:$0xff]
  %v475 = vld [vmem:[%s0 + $0x43] sm:$0xff]
  %v476 = vld [vmem:[%s0 + $0x4b] sm:$0xff]
  %v477 = vld [vmem:[%s0 + $0x53] sm:$0xff]
  %v478 = vpack.c.bf16 %v469, %v468
  %v479 = vpack.c.bf16 %v471, %v470
  %v480 = vpack.c.bf16 %v473, %v472
  %v481 = vpack.c.bf16 %v475, %v474
  %v482 = vpack.c.bf16 %v477, %v476
  %s483 = scalar_lea.vmem %s1, 16
  %v484 = vld [vmem:[%s483] sm:$0xf]
  %v486 = vsel %vm48, %v478, 0
  %v489 = vsel %vm48, %v479, 0
  %v492 = vsel %vm48, %v480, 0
  %v495 = vsel %vm48, %v481, 0
  %v498 = vsel %vm48, %v482, 0
  %v501 = vsel %vm64, %v484, 0
  %503 = vmatprep.subr.bf16.mxu0 0
  %504 = vmatpush1.bf16.msra.mxu0 %v501
  %505 = vmatprep.subr.bf16.mxu0 0
  %506 = vmatpush1.bf16.msra.mxu0 0
  %507 = vmatprep.subr.bf16.mxu0 0
  %508 = vmatpush1.bf16.msra.mxu0 0
  %509 = vmatprep.subr.bf16.mxu0 0
  %510 = vmatpush1.bf16.msra.mxu0 0
  %511 = vmatprep.subr.bf16.mxu0 0
  %512 = vmatpush1.bf16.msra.mxu0 0
  %513 = vmatprep.subr.bf16.mxu0 0
  %514 = vmatpush1.bf16.msra.mxu0 0
  %515 = vmatprep.subr.bf16.mxu0 0
  %516 = vmatpush1.bf16.msra.mxu0 0
  %517 = vmatprep.subr.bf16.mxu0 0
  %518 = vmatpush1.bf16.msra.mxu0 0
  %519 = vmatprep.subr.bf16.mxu0 0
  %520 = vmatpush1.bf16.msra.mxu0 0
  %521 = vmatprep.subr.bf16.mxu0 0
  %522 = vmatpush1.bf16.msra.mxu0 0
  %523 = vmatprep.subr.bf16.mxu0 0
  %524 = vmatpush1.bf16.msra.mxu0 0
  %525 = vmatprep.subr.bf16.mxu0 0
  %526 = vmatpush1.bf16.msra.mxu0 0
  %527 = vmatprep.subr.bf16.mxu0 0
  %528 = vmatpush1.bf16.msra.mxu0 0
  %529 = vmatprep.subr.bf16.mxu0 0
  %530 = vmatpush1.bf16.msra.mxu0 0
  %531 = vmatprep.subr.bf16.mxu0 0
  %532 = vmatpush1.bf16.msra.mxu0 0
  %533 = vmatprep.subr.bf16.mxu0 0
  %534 = vmatpush1.bf16.msra.mxu0 0
  %535 = vmatprep.mubr.bf16.mxu0 0
  %536 = vmatmul.mubr.bf16.gmra.mrb[0].mxu0 %v486
  %v537 = vpop.f32.mrb[0].mxu0
  %v538 = vadd.f32 0.0, %v537
  %v539 = vpop.f32.mrb[0].mxu0
  %v540 = vpop.f32.mrb[0].mxu0
  %v541 = vadd.f32 0.0, %v540
  %v542 = vpop.f32.mrb[0].mxu0
  %543 = vmatprep.mubr.bf16.mxu0 0
  %544 = vmatmul.mubr.bf16.gmra.mrb[0].mxu0 %v489
  %v545 = vpop.f32.mrb[0].mxu0
  %v546 = vadd.f32 0.0, %v545
  %v547 = vpop.f32.mrb[0].mxu0
  %v548 = vpop.f32.mrb[0].mxu0
  %v549 = vadd.f32 0.0, %v548
  %v550 = vpop.f32.mrb[0].mxu0
  %551 = vmatprep.mubr.bf16.mxu0 0
  %552 = vmatmul.mubr.bf16.gmra.mrb[0].mxu0 %v492
  %v553 = vpop.f32.mrb[0].mxu0
  %v554 = vadd.f32 0.0, %v553
  %v555 = vpop.f32.mrb[0].mxu0
  %v556 = vpop.f32.mrb[0].mxu0
  %v557 = vadd.f32 0.0, %v556
  %v558 = vpop.f32.mrb[0].mxu0
  %559 = vmatprep.mubr.bf16.mxu0 0
  %560 = vmatmul.mubr.bf16.gmra.mrb[0].mxu0 %v495
  %v561 = vpop.f32.mrb[0].mxu0
  %v562 = vadd.f32 0.0, %v561
  %v563 = vpop.f32.mrb[0].mxu0
  %v564 = vpop.f32.mrb[0].mxu0
  %v565 = vadd.f32 0.0, %v564
  %v566 = vpop.f32.mrb[0].mxu0
  %567 = vmatprep.mubr.bf16.mxu0 0
  %568 = vmatmul.mubr.bf16.gmra.mrb[0].mxu0 %v498
  %v569 = vpop.f32.mrb[0].mxu0
  %v570 = vadd.f32 0.0, %v569
  %v571 = vpop.f32.mrb[0].mxu0
  %v572 = vpop.f32.mrb[0].mxu0
  %v573 = vadd.f32 0.0, %v572
  %v574 = vpop.f32.mrb[0].mxu0
  %575 = vdwg.mxu0
  %v576 = vadd.f32 %v458, %v538
  %v577 = vadd.f32 %v459, %v541
  %v578 = vadd.f32 %v460, %v546
  %v579 = vadd.f32 %v461, %v549
  %v580 = vadd.f32 %v462, %v554
  %v581 = vadd.f32 %v463, %v557
  %v582 = vadd.f32 %v464, %v562
  %v583 = vadd.f32 %v465, %v565
  %v584 = vadd.f32 %v466, %v570
  %v585 = vadd.f32 %v467, %v573
  %v586 = vld [vmem:[%s0 + $0xc] sm:$0xff]
  %v587 = vld [vmem:[%s0 + $0x14] sm:$0xff]
  %v588 = vld [vmem:[%s0 + $0x1c] sm:$0xff]
  %v589 = vld [vmem:[%s0 + $0x24] sm:$0xff]
  %v590 = vld [vmem:[%s0 + $0x2c] sm:$0xff]
  %v591 = vld [vmem:[%s0 + $0x34] sm:$0xff]
  %v592 = vld [vmem:[%s0 + $0x3c] sm:$0xff]
  %v593 = vld [vmem:[%s0 + $0x44] sm:$0xff]
  %v594 = vld [vmem:[%s0 + $0x4c] sm:$0xff]
  %v595 = vld [vmem:[%s0 + $0x54] sm:$0xff]
  %v596 = vpack.c.bf16 %v587, %v586
  %v597 = vpack.c.bf16 %v589, %v588
  %v598 = vpack.c.bf16 %v591, %v590
  %v599 = vpack.c.bf16 %v593, %v592
  %v600 = vpack.c.bf16 %v595, %v594
  %s601 = scalar_lea.vmem %s1, 20
  %v602 = vld [vmem:[%s601] sm:$0xf]
  %v604 = vsel %vm48, %v596, 0
  %v607 = vsel %vm48, %v597, 0
  %v610 = vsel %vm48, %v598, 0
  %v613 = vsel %vm48, %v599, 0
  %v616 = vsel %vm48, %v600, 0
  %v619 = vsel %vm64, %v602, 0
  %621 = vmatprep.subr.bf16.mxu0 0
  %622 = vmatpush1.bf16.msra.mxu0 %v619
  %623 = vmatprep.subr.bf16.mxu0 0
  %624 = vmatpush1.bf16.msra.mxu0 0
  %625 = vmatprep.subr.bf16.mxu0 0
  %626 = vmatpush1.bf16.msra.mxu0 0
  %627 = vmatprep.subr.bf16.mxu0 0
  %628 = vmatpush1.bf16.msra.mxu0 0
  %629 = vmatprep.subr.bf16.mxu0 0
  %630 = vmatpush1.bf16.msra.mxu0 0
  %631 = vmatprep.subr.bf16.mxu0 0
  %632 = vmatpush1.bf16.msra.mxu0 0
  %633 = vmatprep.subr.bf16.mxu0 0
  %634 = vmatpush1.bf16.msra.mxu0 0
  %635 = vmatprep.subr.bf16.mxu0 0
  %636 = vmatpush1.bf16.msra.mxu0 0
  %637 = vmatprep.subr.bf16.mxu0 0
  %638 = vmatpush1.bf16.msra.mxu0 0
  %639 = vmatprep.subr.bf16.mxu0 0
  %640 = vmatpush1.bf16.msra.mxu0 0
  %641 = vmatprep.subr.bf16.mxu0 0
  %642 = vmatpush1.bf16.msra.mxu0 0
  %643 = vmatprep.subr.bf16.mxu0 0
  %644 = vmatpush1.bf16.msra.mxu0 0
  %645 = vmatprep.subr.bf16.mxu0 0
  %646 = vmatpush1.bf16.msra.mxu0 0
  %647 = vmatprep.subr.bf16.mxu0 0
  %648 = vmatpush1.bf16.msra.mxu0 0
  %649 = vmatprep.subr.bf16.mxu0 0
  %650 = vmatpush1.bf16.msra.mxu0 0
  %651 = vmatprep.subr.bf16.mxu0 0
  %652 = vmatpush1.bf16.msra.mxu0 0
  %653 = vmatprep.mubr.bf16.mxu0 0
  %654 = vmatmul.mubr.bf16.gmra.mrb[0].mxu0 %v604
  %v655 = vpop.f32.mrb[0].mxu0
  %v656 = vadd.f32 0.0, %v655
  %v657 = vpop.f32.mrb[0].mxu0
  %v658 = vpop.f32.mrb[0].mxu0
  %v659 = vadd.f32 0.0, %v658
  %v660 = vpop.f32.mrb[0].mxu0
  %661 = vmatprep.mubr.bf16.mxu0 0
  %662 = vmatmul.mubr.bf16.gmra.mrb[0].mxu0 %v607
  %v663 = vpop.f32.mrb[0].mxu0
  %v664 = vadd.f32 0.0, %v663
  %v665 = vpop.f32.mrb[0].mxu0
  %v666 = vpop.f32.mrb[0].mxu0
  %v667 = vadd.f32 0.0, %v666
  %v668 = vpop.f32.mrb[0].mxu0
  %669 = vmatprep.mubr.bf16.mxu0 0
  %670 = vmatmul.mubr.bf16.gmra.mrb[0].mxu0 %v610
  %v671 = vpop.f32.mrb[0].mxu0
  %v672 = vadd.f32 0.0, %v671
  %v673 = vpop.f32.mrb[0].mxu0
  %v674 = vpop.f32.mrb[0].mxu0
  %v675 = vadd.f32 0.0, %v674
  %v676 = vpop.f32.mrb[0].mxu0
  %677 = vmatprep.mubr.bf16.mxu0 0
  %678 = vmatmul.mubr.bf16.gmra.mrb[0].mxu0 %v613
  %v679 = vpop.f32.mrb[0].mxu0
  %v680 = vadd.f32 0.0, %v679
  %v681 = vpop.f32.mrb[0].mxu0
  %v682 = vpop.f32.mrb[0].mxu0
  %v683 = vadd.f32 0.0, %v682
  %v684 = vpop.f32.mrb[0].mxu0
  %685 = vmatprep.mubr.bf16.mxu0 0
  %686 = vmatmul.mubr.bf16.gmra.mrb[0].mxu0 %v616
  %v687 = vpop.f32.mrb[0].mxu0
  %v688 = vadd.f32 0.0, %v687
  %v689 = vpop.f32.mrb[0].mxu0
  %v690 = vpop.f32.mrb[0].mxu0
  %v691 = vadd.f32 0.0, %v690
  %v692 = vpop.f32.mrb[0].mxu0
  %693 = vdwg.mxu0
  %v694 = vadd.f32 %v576, %v656
  %v695 = vadd.f32 %v577, %v659
  %v696 = vadd.f32 %v578, %v664
  %v697 = vadd.f32 %v579, %v667
  %v698 = vadd.f32 %v580, %v672
  %v699 = vadd.f32 %v581, %v675
  %v700 = vadd.f32 %v582, %v680
  %v701 = vadd.f32 %v583, %v683
  %v702 = vadd.f32 %v584, %v688
  %v703 = vadd.f32 %v585, %v691
  %v704 = vld [vmem:[%s0 + $0x14] sm:$0xff]
  %v705 = vld [vmem:[%s0 + $0x1c] sm:$0xff]
  %v706 = vld [vmem:[%s0 + $0x24] sm:$0xff]
  %v707 = vld [vmem:[%s0 + $0x2c] sm:$0xff]
  %v708 = vld [vmem:[%s0 + $0x34] sm:$0xff]
  %v709 = vld [vmem:[%s0 + $0x3c] sm:$0xff]
  %v710 = vld [vmem:[%s0 + $0x44] sm:$0xff]
  %v711 = vld [vmem:[%s0 + $0x4c] sm:$0xff]
  %v712 = vld [vmem:[%s0 + $0x54] sm:$0xff]
  %v713 = vld [vmem:[%s0 + $0x5c] sm:$0xff]
  %v714 = vpack.c.bf16 %v705, %v704
  %v715 = vpack.c.bf16 %v707, %v706
  %v716 = vpack.c.bf16 %v709, %v708
  %v717 = vpack.c.bf16 %v711, %v710
  %v718 = vpack.c.bf16 %v713, %v712
  %s719 = scalar_lea.vmem %s1, 24
  %v720 = vld [vmem:[%s719] sm:$0xf]
  %v722 = vsel %vm48, %v714, 0
  %v725 = vsel %vm48, %v715, 0
  %v728 = vsel %vm48, %v716, 0
  %v731 = vsel %vm48, %v717, 0
  %v734 = vsel %vm48, %v718, 0
  %v737 = vsel %vm64, %v720, 0
  %739 = vmatprep.subr.bf16.mxu0 0
  %740 = vmatpush1.bf16.msra.mxu0 %v737
  %741 = vmatprep.subr.bf16.mxu0 0
  %742 = vmatpush1.bf16.msra.mxu0 0
  %743 = vmatprep.subr.bf16.mxu0 0
  %744 = vmatpush1.bf16.msra.mxu0 0
  %745 = vmatprep.subr.bf16.mxu0 0
  %746 = vmatpush1.bf16.msra.mxu0 0
  %747 = vmatprep.subr.bf16.mxu0 0
  %748 = vmatpush1.bf16.msra.mxu0 0
  %749 = vmatprep.subr.bf16.mxu0 0
  %750 = vmatpush1.bf16.msra.mxu0 0
  %751 = vmatprep.subr.bf16.mxu0 0
  %752 = vmatpush1.bf16.msra.mxu0 0
  %753 = vmatprep.subr.bf16.mxu0 0
  %754 = vmatpush1.bf16.msra.mxu0 0
  %755 = vmatprep.subr.bf16.mxu0 0
  %756 = vmatpush1.bf16.msra.mxu0 0
  %757 = vmatprep.subr.bf16.mxu0 0
  %758 = vmatpush1.bf16.msra.mxu0 0
  %759 = vmatprep.subr.bf16.mxu0 0
  %760 = vmatpush1.bf16.msra.mxu0 0
  %761 = vmatprep.subr.bf16.mxu0 0
  %762 = vmatpush1.bf16.msra.mxu0 0
  %763 = vmatprep.subr.bf16.mxu0 0
  %764 = vmatpush1.bf16.msra.mxu0 0
  %765 = vmatprep.subr.bf16.mxu0 0
  %766 = vmatpush1.bf16.msra.mxu0 0
  %767 = vmatprep.subr.bf16.mxu0 0
  %768 = vmatpush1.bf16.msra.mxu0 0
  %769 = vmatprep.subr.bf16.mxu0 0
  %770 = vmatpush1.bf16.msra.mxu0 0
  %771 = vmatprep.mubr.bf16.mxu0 0
  %772 = vmatmul.mubr.bf16.gmra.mrb[0].mxu0 %v722
  %v773 = vpop.f32.mrb[0].mxu0
  %v774 = vadd.f32 0.0, %v773
  %v775 = vpop.f32.mrb[0].mxu0
  %v776 = vpop.f32.mrb[0].mxu0
  %v777 = vadd.f32 0.0, %v776
  %v778 = vpop.f32.mrb[0].mxu0
  %779 = vmatprep.mubr.bf16.mxu0 0
  %780 = vmatmul.mubr.bf16.gmra.mrb[0].mxu0 %v725
  %v781 = vpop.f32.mrb[0].mxu0
  %v782 = vadd.f32 0.0, %v781
  %v783 = vpop.f32.mrb[0].mxu0
  %v784 = vpop.f32.mrb[0].mxu0
  %v785 = vadd.f32 0.0, %v784
  %v786 = vpop.f32.mrb[0].mxu0
  %787 = vmatprep.mubr.bf16.mxu0 0
  %788 = vmatmul.mubr.bf16.gmra.mrb[0].mxu0 %v728
  %v789 = vpop.f32.mrb[0].mxu0
  %v790 = vadd.f32 0.0, %v789
  %v791 = vpop.f32.mrb[0].mxu0
  %v792 = vpop.f32.mrb[0].mxu0
  %v793 = vadd.f32 0.0, %v792
  %v794 = vpop.f32.mrb[0].mxu0
  %795 = vmatprep.mubr.bf16.mxu0 0
  %796 = vmatmul.mubr.bf16.gmra.mrb[0].mxu0 %v731
  %v797 = vpop.f32.mrb[0].mxu0
  %v798 = vadd.f32 0.0, %v797
  %v799 = vpop.f32.mrb[0].mxu0
  %v800 = vpop.f32.mrb[0].mxu0
  %v801 = vadd.f32 0.0, %v800
  %v802 = vpop.f32.mrb[0].mxu0
  %803 = vmatprep.mubr.bf16.mxu0 0
  %804 = vmatmul.mubr.bf16.gmra.mrb[0].mxu0 %v734
  %v805 = vpop.f32.mrb[0].mxu0
  %v806 = vadd.f32 0.0, %v805
  %v807 = vpop.f32.mrb[0].mxu0
  %v808 = vpop.f32.mrb[0].mxu0
  %v809 = vadd.f32 0.0, %v808
  %v810 = vpop.f32.mrb[0].mxu0
  %811 = vdwg.mxu0
  %v812 = vadd.f32 %v694, %v774
  %v813 = vadd.f32 %v695, %v777
  %v814 = vadd.f32 %v696, %v782
  %v815 = vadd.f32 %v697, %v785
  %v816 = vadd.f32 %v698, %v790
  %v817 = vadd.f32 %v699, %v793
  %v818 = vadd.f32 %v700, %v798
  %v819 = vadd.f32 %v701, %v801
  %v820 = vadd.f32 %v702, %v806
  %v821 = vadd.f32 %v703, %v809
  %v822 = vld [vmem:[%s0 + $0x15] sm:$0xff]
  %v823 = vld [vmem:[%s0 + $0x1d] sm:$0xff]
  %v824 = vld [vmem:[%s0 + $0x25] sm:$0xff]
  %v825 = vld [vmem:[%s0 + $0x2d] sm:$0xff]
  %v826 = vld [vmem:[%s0 + $0x35] sm:$0xff]
  %v827 = vld [vmem:[%s0 + $0x3d] sm:$0xff]
  %v828 = vld [vmem:[%s0 + $0x45] sm:$0xff]
  %v829 = vld [vmem:[%s0 + $0x4d] sm:$0xff]
  %v830 = vld [vmem:[%s0 + $0x55] sm:$0xff]
  %v831 = vld [vmem:[%s0 + $0x5d] sm:$0xff]
  %v832 = vpack.c.bf16 %v823, %v822
  %v833 = vpack.c.bf16 %v825, %v824
  %v834 = vpack.c.bf16 %v827, %v826
  %v835 = vpack.c.bf16 %v829, %v828
  %v836 = vpack.c.bf16 %v831, %v830
  %s837 = scalar_lea.vmem %s1, 28
  %v838 = vld [vmem:[%s837] sm:$0xf]
  %v840 = vsel %vm48, %v832, 0
  %v843 = vsel %vm48, %v833, 0
  %v846 = vsel %vm48, %v834, 0
  %v849 = vsel %vm48, %v835, 0
  %v852 = vsel %vm48, %v836, 0
  %v855 = vsel %vm64, %v838, 0
  %857 = vmatprep.subr.bf16.mxu0 0
  %858 = vmatpush1.bf16.msra.mxu0 %v855
  %859 = vmatprep.subr.bf16.mxu0 0
  %860 = vmatpush1.bf16.msra.mxu0 0
  %861 = vmatprep.subr.bf16.mxu0 0
  %862 = vmatpush1.bf16.msra.mxu0 0
  %863 = vmatprep.subr.bf16.mxu0 0
  %864 = vmatpush1.bf16.msra.mxu0 0
  %865 = vmatprep.subr.bf16.mxu0 0
  %866 = vmatpush1.bf16.msra.mxu0 0
  %867 = vmatprep.subr.bf16.mxu0 0
  %868 = vmatpush1.bf16.msra.mxu0 0
  %869 = vmatprep.subr.bf16.mxu0 0
  %870 = vmatpush1.bf16.msra.mxu0 0
  %871 = vmatprep.subr.bf16.mxu0 0
  %872 = vmatpush1.bf16.msra.mxu0 0
  %873 = vmatprep.subr.bf16.mxu0 0
  %874 = vmatpush1.bf16.msra.mxu0 0
  %875 = vmatprep.subr.bf16.mxu0 0
  %876 = vmatpush1.bf16.msra.mxu0 0
  %877 = vmatprep.subr.bf16.mxu0 0
  %878 = vmatpush1.bf16.msra.mxu0 0
  %879 = vmatprep.subr.bf16.mxu0 0
  %880 = vmatpush1.bf16.msra.mxu0 0
  %881 = vmatprep.subr.bf16.mxu0 0
  %882 = vmatpush1.bf16.msra.mxu0 0
  %883 = vmatprep.subr.bf16.mxu0 0
  %884 = vmatpush1.bf16.msra.mxu0 0
  %885 = vmatprep.subr.bf16.mxu0 0
  %886 = vmatpush1.bf16.msra.mxu0 0
  %887 = vmatprep.subr.bf16.mxu0 0
  %888 = vmatpush1.bf16.msra.mxu0 0
  %889 = vmatprep.mubr.bf16.mxu0 0
  %890 = vmatmul.mubr.bf16.gmra.mrb[0].mxu0 %v840
  %v891 = vpop.f32.mrb[0].mxu0
  %v892 = vadd.f32 0.0, %v891
  %v893 = vpop.f32.mrb[0].mxu0
  %v894 = vpop.f32.mrb[0].mxu0
  %v895 = vadd.f32 0.0, %v894
  %v896 = vpop.f32.mrb[0].mxu0
  %897 = vmatprep.mubr.bf16.mxu0 0
  %898 = vmatmul.mubr.bf16.gmra.mrb[0].mxu0 %v843
  %v899 = vpop.f32.mrb[0].mxu0
  %v900 = vadd.f32 0.0, %v899
  %v901 = vpop.f32.mrb[0].mxu0
  %v902 = vpop.f32.mrb[0].mxu0
  %v903 = vadd.f32 0.0, %v902
  %v904 = vpop.f32.mrb[0].mxu0
  %905 = vmatprep.mubr.bf16.mxu0 0
  %906 = vmatmul.mubr.bf16.gmra.mrb[0].mxu0 %v846
  %v907 = vpop.f32.mrb[0].mxu0
  %v908 = vadd.f32 0.0, %v907
  %v909 = vpop.f32.mrb[0].mxu0
  %v910 = vpop.f32.mrb[0].mxu0
  %v911 = vadd.f32 0.0, %v910
  %v912 = vpop.f32.mrb[0].mxu0
  %913 = vmatprep.mubr.bf16.mxu0 0
  %914 = vmatmul.mubr.bf16.gmra.mrb[0].mxu0 %v849
  %v915 = vpop.f32.mrb[0].mxu0
  %v916 = vadd.f32 0.0, %v915
  %v917 = vpop.f32.mrb[0].mxu0
  %v918 = vpop.f32.mrb[0].mxu0
  %v919 = vadd.f32 0.0, %v918
  %v920 = vpop.f32.mrb[0].mxu0
  %921 = vmatprep.mubr.bf16.mxu0 0
  %922 = vmatmul.mubr.bf16.gmra.mrb[0].mxu0 %v852
  %v923 = vpop.f32.mrb[0].mxu0
  %v924 = vadd.f32 0.0, %v923
  %v925 = vpop.f32.mrb[0].mxu0
  %v926 = vpop.f32.mrb[0].mxu0
  %v927 = vadd.f32 0.0, %v926
  %v928 = vpop.f32.mrb[0].mxu0
  %929 = vdwg.mxu0
  %v930 = vadd.f32 %v812, %v892
  %v931 = vadd.f32 %v813, %v895
  %v932 = vadd.f32 %v814, %v900
  %v933 = vadd.f32 %v815, %v903
  %v934 = vadd.f32 %v816, %v908
  %v935 = vadd.f32 %v817, %v911
  %v936 = vadd.f32 %v818, %v916
  %v937 = vadd.f32 %v819, %v919
  %v938 = vadd.f32 %v820, %v924
  %v939 = vadd.f32 %v821, %v927
  %v940 = vld [vmem:[%s0 + $0x16] sm:$0xff]
  %v941 = vld [vmem:[%s0 + $0x1e] sm:$0xff]
  %v942 = vld [vmem:[%s0 + $0x26] sm:$0xff]
  %v943 = vld [vmem:[%s0 + $0x2e] sm:$0xff]
  %v944 = vld [vmem:[%s0 + $0x36] sm:$0xff]
  %v945 = vld [vmem:[%s0 + $0x3e] sm:$0xff]
  %v946 = vld [vmem:[%s0 + $0x46] sm:$0xff]
  %v947 = vld [vmem:[%s0 + $0x4e] sm:$0xff]
  %v948 = vld [vmem:[%s0 + $0x56] sm:$0xff]
  %v949 = vld [vmem:[%s0 + $0x5e] sm:$0xff]
  %v950 = vpack.c.bf16 %v941, %v940
  %v951 = vpack.c.bf16 %v943, %v942
  %v952 = vpack.c.bf16 %v945, %v944
  %v953 = vpack.c.bf16 %v947, %v946
  %v954 = vpack.c.bf16 %v949, %v948
  %s955 = scalar_lea.vmem %s1, 32
  %v956 = vld [vmem:[%s955] sm:$0xf]
  %v958 = vsel %vm48, %v950, 0
  %v961 = vsel %vm48, %v951, 0
  %v964 = vsel %vm48, %v952, 0
  %v967 = vsel %vm48, %v953, 0
  %v970 = vsel %vm48, %v954, 0
  %v973 = vsel %vm64, %v956, 0
  %975 = vmatprep.subr.bf16.mxu0 0
  %976 = vmatpush1.bf16.msra.mxu0 %v973
  %977 = vmatprep.subr.bf16.mxu0 0
  %978 = vmatpush1.bf16.msra.mxu0 0
  %979 = vmatprep.subr.bf16.mxu0 0
  %980 = vmatpush1.bf16.msra.mxu0 0
  %981 = vmatprep.subr.bf16.mxu0 0
  %982 = vmatpush1.bf16.msra.mxu0 0
  %983 = vmatprep.subr.bf16.mxu0 0
  %984 = vmatpush1.bf16.msra.mxu0 0
  %985 = vmatprep.subr.bf16.mxu0 0
  %986 = vmatpush1.bf16.msra.mxu0 0
  %987 = vmatprep.subr.bf16.mxu0 0
  %988 = vmatpush1.bf16.msra.mxu0 0
  %989 = vmatprep.subr.bf16.mxu0 0
  %990 = vmatpush1.bf16.msra.mxu0 0
  %991 = vmatprep.subr.bf16.mxu0 0
  %992 = vmatpush1.bf16.msra.mxu0 0
  %993 = vmatprep.subr.bf16.mxu0 0
  %994 = vmatpush1.bf16.msra.mxu0 0
  %995 = vmatprep.subr.bf16.mxu0 0
  %996 = vmatpush1.bf16.msra.mxu0 0
  %997 = vmatprep.subr.bf16.mxu0 0
  %998 = vmatpush1.bf16.msra.mxu0 0
  %999 = vmatprep.subr.bf16.mxu0 0
  %1000 = vmatpush1.bf16.msra.mxu0 0
  %1001 = vmatprep.subr.bf16.mxu0 0
  %1002 = vmatpush1.bf16.msra.mxu0 0
  %1003 = vmatprep.subr.bf16.mxu0 0
  %1004 = vmatpush1.bf16.msra.mxu0 0
  %1005 = vmatprep.subr.bf16.mxu0 0
  %1006 = vmatpush1.bf16.msra.mxu0 0
  %1007 = vmatprep.mubr.bf16.mxu0 0
  %1008 = vmatmul.mubr.bf16.gmra.mrb[0].mxu0 %v958
  %v1009 = vpop.f32.mrb[0].mxu0
  %v1010 = vadd.f32 0.0, %v1009
  %v1011 = vpop.f32.mrb[0].mxu0
  %v1012 = vpop.f32.mrb[0].mxu0
  %v1013 = vadd.f32 0.0, %v1012
  %v1014 = vpop.f32.mrb[0].mxu0
  %1015 = vmatprep.mubr.bf16.mxu0 0
  %1016 = vmatmul.mubr.bf16.gmra.mrb[0].mxu0 %v961
  %v1017 = vpop.f32.mrb[0].mxu0
  %v1018 = vadd.f32 0.0, %v1017
  %v1019 = vpop.f32.mrb[0].mxu0
  %v1020 = vpop.f32.mrb[0].mxu0
  %v1021 = vadd.f32 0.0, %v1020
  %v1022 = vpop.f32.mrb[0].mxu0
  %1023 = vmatprep.mubr.bf16.mxu0 0
  %1024 = vmatmul.mubr.bf16.gmra.mrb[0].mxu0 %v964
  %v1025 = vpop.f32.mrb[0].mxu0
  %v1026 = vadd.f32 0.0, %v1025
  %v1027 = vpop.f32.mrb[0].mxu0
  %v1028 = vpop.f32.mrb[0].mxu0
  %v1029 = vadd.f32 0.0, %v1028
  %v1030 = vpop.f32.mrb[0].mxu0
  %1031 = vmatprep.mubr.bf16.mxu0 0
  %1032 = vmatmul.mubr.bf16.gmra.mrb[0].mxu0 %v967
  %v1033 = vpop.f32.mrb[0].mxu0
  %v1034 = vadd.f32 0.0, %v1033
  %v1035 = vpop.f32.mrb[0].mxu0
  %v1036 = vpop.f32.mrb[0].mxu0
  %v1037 = vadd.f32 0.0, %v1036
  %v1038 = vpop.f32.mrb[0].mxu0
  %1039 = vmatprep.mubr.bf16.mxu0 0
  %1040 = vmatmul.mubr.bf16.gmra.mrb[0].mxu0 %v970
  %v1041 = vpop.f32.mrb[0].mxu0
  %v1042 = vadd.f32 0.0, %v1041
  %v1043 = vpop.f32.mrb[0].mxu0
  %v1044 = vpop.f32.mrb[0].mxu0
  %v1045 = vadd.f32 0.0, %v1044
  %v1046 = vpop.f32.mrb[0].mxu0
  %1047 = vdwg.mxu0
  %v1048 = vadd.f32 %v930, %v1010
  %v1049 = vadd.f32 %v931, %v1013
  %v1050 = vadd.f32 %v932, %v1018
  %v1051 = vadd.f32 %v933, %v1021
  %v1052 = vadd.f32 %v934, %v1026
  %v1053 = vadd.f32 %v935, %v1029
  %v1054 = vadd.f32 %v936, %v1034
  %v1055 = vadd.f32 %v937, %v1037
  %v1056 = vadd.f32 %v938, %v1042
  %v1057 = vadd.f32 %v939, %v1045
  %v1058 = vld [vmem:[%s2] sm:$0x1]
  %v1060 = vlaneseq
  %v1061 = vshrl.u32 %v1060, 7
  %v1062 = vsub.s32 0, %v1061
  %v1063 = vrot.slane %v1058, %v1062
  %v1065 = vadd.f32 %v1048, %v1063
  %v1066 = vadd.f32 %v1049, %v1063
  %v1067 = vadd.f32 %v1050, %v1063
  %v1068 = vadd.f32 %v1051, %v1063
  %v1069 = vadd.f32 %v1052, %v1063
  %v1070 = vadd.f32 %v1053, %v1063
  %v1071 = vadd.f32 %v1054, %v1063
  %v1072 = vadd.f32 %v1055, %v1063
  %v1073 = vadd.f32 %v1056, %v1063
  %v1074 = vadd.f32 %v1057, %v1063
  %v1075 = vmax.f32 %v1065, 0.0
  %v1076 = vmax.f32 %v1066, 0.0
  %v1077 = vmax.f32 %v1067, 0.0
  %v1078 = vmax.f32 %v1068, 0.0
  %v1079 = vmax.f32 %v1069, 0.0
  %v1080 = vmax.f32 %v1070, 0.0
  %v1081 = vmax.f32 %v1071, 0.0
  %v1082 = vmax.f32 %v1072, 0.0
  %v1083 = vmax.f32 %v1073, 0.0
  %v1084 = vmax.f32 %v1074, 0.0
  %v1085 = vpack.c.bf16 %v1076, %v1075
  %v1086 = vpack.c.bf16 %v1078, %v1077
  %v1087 = vpack.c.bf16 %v1080, %v1079
  %v1088 = vpack.c.bf16 %v1082, %v1081
  %v1089 = vpack.c.bf16 %v1084, %v1083
  %v1095 = vunpack.c.l.b16 %v1085
  %v1096 = vunpack.c.h.b16 %v1085
  %v1097 = vunpack.c.l.b16 %v1086
  %v1098 = vunpack.c.h.b16 %v1086
  %v1099 = vunpack.c.l.b16 %v1087
  %v1100 = vunpack.c.h.b16 %v1087
  %v1101 = vunpack.c.l.b16 %v1088
  %v1102 = vunpack.c.h.b16 %v1088
  %v1103 = vunpack.c.l.b16 %v1089
  %v1104 = vunpack.c.h.b16 %v1089
  %v1105 = vpack.c.b16 %v1095, %v1095
  %v1106 = vpack.c.b16 %v1096, %v1096
  %v1107 = vpack.c.b16 %v1097, %v1097
  %v1108 = vpack.c.b16 %v1098, %v1098
  %v1109 = vpack.c.b16 %v1099, %v1099
  %v1110 = vpack.c.b16 %v1100, %v1100
  %v1111 = vpack.c.b16 %v1101, %v1101
  %v1112 = vpack.c.b16 %v1102, %v1102
  %v1113 = vpack.c.b16 %v1103, %v1103
  %v1114 = vpack.c.b16 %v1104, %v1104
  %vm1125 = vcmask 519168
  %1126 = vst.msk [vmem:[%s3] sm:$0xf] %vm1125, %v1105
  %1127 = vst.msk [vmem:[%s3 + $0x4] sm:$0xf] %vm1125, %v1106
  %1128 = vst.msk [vmem:[%s3 + $0x8] sm:$0xf] %vm1125, %v1107
  %1129 = vst.msk [vmem:[%s3 + $0xc] sm:$0xf] %vm1125, %v1108
  %1130 = vst.msk [vmem:[%s3 + $0x10] sm:$0xf] %vm1125, %v1109
  %1131 = vst.msk [vmem:[%s3 + $0x14] sm:$0xf] %vm1125, %v1110
  %1132 = vst.msk [vmem:[%s3 + $0x18] sm:$0xf] %vm1125, %v1111
  %1133 = vst.msk [vmem:[%s3 + $0x1c] sm:$0xf] %vm1125, %v1112
  %1134 = vst.msk [vmem:[%s3 + $0x20] sm:$0xf] %vm1125, %v1113
  %1135 = vst.msk [vmem:[%s3 + $0x24] sm:$0xf] %vm1125, %v1114
  // Predicated region
  $region14: #{tpu_custom_call.1} parent=0 // pred_check
    _
  $region15: #{tpu_custom_call.1} parent=0 // pred_check_branch
    %1137 = sbr.rel (0) target = $region17
  $region16: #{tpu_custom_call.1} parent=0 // pred_region
    _
  $region17: #{tpu_custom_call.1} parent=0 // pred_fallthru
    _
  // Predicated region
  $region18: #{tpu_custom_call.1} parent=0 // pred_check
    _
  $region19: #{tpu_custom_call.1} parent=0 // pred_check_branch
    %1139 = sbr.rel (0) target = $region21
  $region20: #{tpu_custom_call.1} parent=0 // pred_region
    _
  $region21: #{tpu_custom_call.1} parent=0 // pred_fallthru
    _

</llo_original>
